<compile_context>
chip_gen: v5e
topology: v5e:2x2
jax: 0.10.0
libtpu: 0.0.40
codegen_flags: <defaults>
</compile_context>

<pallas_src>
import functools

import jax
import jax.numpy as jnp
from jax.experimental import pallas as pl
from jax.experimental.pallas import tpu as pltpu

EPS = 1e-6


def _gem_kernel(p_ref, x_ref, o_ref, acc_ref, *, n_points, tile_n, p_int):
    # p_ref   : SMEM f32[1]            (learnable GeM exponent)
    # x_ref   : VMEM [TB, TN, TC]      (tile of point features)
    # o_ref   : VMEM [TB, 1, TC]       (pooled output, resident across k)
    # acc_ref : VMEM f32[TB, 1, TC]    (running sum scratch)
    k = pl.program_id(2)
    last_k = pl.num_programs(2) - 1

    @pl.when(k == 0)
    def _():
        acc_ref[...] = jnp.zeros_like(acc_ref)

    x = x_ref[...].astype(jnp.float32)           # upcast (bf16 inputs OK)
    x = jnp.maximum(x, EPS)                      # clamp(min=eps) -> x > 0

    if p_int is not None:
        # Static small-integer exponent: pure VPU, no transcendentals.
        xp = x
        for _ in range(p_int - 1):
            xp = xp * x
    else:
        p = p_ref[0]
        xp = jnp.exp(p * jnp.log(x))             # x ** p: 1 log + 1 exp / elem

    if n_points % tile_n != 0:
        rem = n_points % tile_n

        # Only the last k-tile has padded rows; confine the masking VALU work
        # (iota + compare + select) to that single tile.
        @pl.when(k == last_k)
        def _():
            row = jax.lax.broadcasted_iota(jnp.int32, xp.shape, 1)
            acc_ref[...] += jnp.sum(jnp.where(row < rem, xp, 0.0),
                                    axis=1, keepdims=True)

        @pl.when(k != last_k)
        def _():
            acc_ref[...] += jnp.sum(xp, axis=1, keepdims=True)
    else:
        acc_ref[...] += jnp.sum(xp, axis=1, keepdims=True)

    @pl.when(k == last_k)
    def _():
        mean = acc_ref[...] * (1.0 / n_points)       # true N, not padded count
        inv_p = 1.0 / p_ref[0]                       # scalar, once per block
        o_ref[...] = jnp.exp(jnp.log(mean) * inv_p).astype(o_ref.dtype)


def _vmem_capacity_bytes():
    """Per-core VMEM capacity; conservative (v7x) fallback if query fails."""
    try:
        info = pltpu.get_tpu_info()
        cap = getattr(info, "vmem_capacity_bytes", None)
        if cap:
            return int(cap)
    except Exception:
        pass
    return 64 * 1024 * 1024


def mink_gem(x, p, *, tile_bytes=None, p_static=None):
    """x: [B, N, C] dense point features (f32 or bf16); p: f32[1] -> [B, C].

    p_static: optional small integer equal to p[0]; enables the x*x*x fast
    path (no transcendentals in the hot loop).
    """
    B, N, C = x.shape
    itemsize = jnp.dtype(x.dtype).itemsize
    sub = max(8, 32 // itemsize)            # sublane packing: 8 f32 / 16 bf16

    p_int = None
    if p_static is not None:
        p_int = int(p_static)
        assert p_int == p_static and 1 <= p_int <= 8, "p_static must be a small int"

    # ---- one generation-aware VMEM budget drives both tile size and limit ----
    vmem_cap = _vmem_capacity_bytes()
    big_vmem = vmem_cap >= 100 * 1024 * 1024            # v5e / v6e (128 MiB)
    vmem_budget = (80 if big_vmem else 48) * 1024 * 1024
    if tile_bytes is None:
        # Bigger tiles where the kernel is HBM/DMA-bound (v5e, f32-v6e);
        # v7x (EUP-bound, 64 MiB VMEM) stays at 4 MiB.
        tile_bytes = (8 if big_vmem else 4) * 1024 * 1024
    # Clamp so 2x double-buffered input tile + out/scratch + headroom fits.
    tile_bytes = max(sub * 128 * itemsize,
                     min(tile_bytes, (vmem_budget - (4 << 20)) // 2))

    # ---- channel tiling (lane axis, multiples of 128) ----
    tc = C
    if C % 256 == 0 and B == 1:
        tc = C // 2               # give v7x's 2nd TensorCore a parallel block
    while tc % 256 == 0 and tc * sub * itemsize > tile_bytes:
        tc //= 2                  # huge C: keep at least `sub` rows per tile
    num_c = C // tc

    # ---- reduction tiling (point axis) ----
    row_bytes = tc * itemsize
    rows = max(sub, (tile_bytes // row_bytes // sub) * sub)
    tn = N if rows >= N else rows
    num_k = -(-N // tn)

    # ---- batch blocking (small-N path: amortize per-step overhead) ----
    tb = 1
    if num_k == 1 and B > 1:
        budget_tb = max(1, tile_bytes // (tn * tc * itemsize))
        target = min(B, budget_tb)
        if B >= 4:
            target = min(target, max(1, B // 2))   # keep >=2 parallel blocks
        for d in range(target, 0, -1):
            if B % d == 0:
                tb = d
                break
    num_b = B // tb

    # ---- explicit VMEM limit matching the actual request ----
    tile_actual = tb * tn * tc * itemsize
    need = 2 * tile_actual + 4 * tb * tc * (itemsize + 4) + (2 << 20)
    vmem_limit = min(vmem_budget, max(32 * 1024 * 1024, need))

    if p_int is None:
        flops, trans = 3 * B * N * C, 2 * B * N * C + 2 * B * C
    else:
        flops, trans = (p_int + 2) * B * N * C, 2 * B * C
    cost = pl.CostEstimate(
        flops=flops, transcendentals=trans,
        bytes_accessed=B * N * C * itemsize + B * C * itemsize + 4)

    kernel = functools.partial(_gem_kernel, n_points=N, tile_n=tn, p_int=p_int)

    out = pl.pallas_call(
        kernel,
        out_shape=jax.ShapeDtypeStruct((B, 1, C), x.dtype),
        grid=(num_b, num_c, num_k),
        in_specs=[
            pl.BlockSpec(memory_space=pltpu.MemorySpace.SMEM),       # p (scalar)
            pl.BlockSpec((tb, tn, tc), lambda b, c, k: (b, k, c)),   # point tile
        ],
        out_specs=pl.BlockSpec((tb, 1, tc), lambda b, c, k: (b, 0, c)),
        scratch_shapes=[pltpu.VMEM((tb, 1, tc), jnp.float32)],
        compiler_params=pltpu.CompilerParams(
            dimension_semantics=("parallel", "parallel", "arbitrary"),
            vmem_limit_bytes=vmem_limit,
        ),
        cost_estimate=cost,
    )(p, x)
    return out.reshape(B, C)


def mink_gem_ref(x, p):
    xc = jnp.maximum(x.astype(jnp.float32), EPS)
    return (jnp.mean(xc ** p[0], axis=1) ** (1.0 / p[0])).astype(x.dtype)


if __name__ == "__main__":
    key = jax.random.PRNGKey(0)
    k1, k2, k3, k4 = jax.random.split(key, 4)

    # Deterministic parameter init, as in __init__: p = ones(1) * 3
    p = jnp.ones((1,), dtype=jnp.float32) * 3.0

    # Case 1: small N -> batch-blocked single-tile path (tb = B).
    B, N, C = 2, 16, 128
    x = jax.random.uniform(k1, (B, N, C), dtype=jnp.float32, minval=-0.5, maxval=2.0)
    out = mink_gem(x, p)
    jax.block_until_ready(out)
    ref = mink_gem_ref(x, p)
    assert out.shape == (B, C)
    assert jnp.allclose(out, ref, rtol=1e-4, atol=1e-5), (
        f"case1 max abs err {jnp.max(jnp.abs(out - ref))}")

    # Case 2: tiled reduction with a partial (masked) last tile
    # (N = 20, tile = 8 rows -> 3 tiles, last-tile mask gated by pl.when).
    B2, N2, C2 = 2, 20, 128
    x2 = jax.random.uniform(k2, (B2, N2, C2), dtype=jnp.float32,
                            minval=-0.5, maxval=2.0)
    out2 = mink_gem(x2, p, tile_bytes=8 * C2 * 4)
    jax.block_until_ready(out2)
    ref2 = mink_gem_ref(x2, p)
    assert jnp.allclose(out2, ref2, rtol=1e-4, atol=1e-5), (
        f"case2 max abs err {jnp.max(jnp.abs(out2 - ref2))}")

    # Case 3: B == 1 with C % 256 == 0 -> channel-split grid (both v7x TCs).
    B3, N3, C3 = 1, 16, 256
    x3 = jax.random.uniform(k3, (B3, N3, C3), dtype=jnp.float32,
                            minval=-0.5, maxval=2.0)
    out3 = mink_gem(x3, p)
    jax.block_until_ready(out3)
    ref3 = mink_gem_ref(x3, p)
    assert out3.shape == (B3, C3)
    assert jnp.allclose(out3, ref3, rtol=1e-4, atol=1e-5), (
        f"case3 max abs err {jnp.max(jnp.abs(out3 - ref3))}")

    # Case 4: bf16 HBM streaming (f32 math inside the kernel).
    B4, N4, C4 = 2, 64, 128
    x4 = jax.random.uniform(k4, (B4, N4, C4), dtype=jnp.float32,
                            minval=-0.5, maxval=2.0).astype(jnp.bfloat16)
    out4 = mink_gem(x4, p)
    jax.block_until_ready(out4)
    ref4 = mink_gem_ref(x4, p)
    assert jnp.allclose(out4.astype(jnp.float32), ref4.astype(jnp.float32),
                        rtol=2e-2, atol=2e-2), (
        f"case4 max abs err {jnp.max(jnp.abs(out4.astype(jnp.float32) - ref4.astype(jnp.float32)))}")

    # Case 5: static-integer-p fast path (x*x*x on the VPU, no log/exp hot loop).
    out5 = mink_gem(x, p, p_static=3)
    jax.block_until_ready(out5)
    assert jnp.allclose(out5, ref, rtol=1e-4, atol=1e-5), (
        f"case5 max abs err {jnp.max(jnp.abs(out5 - ref))}")

    print("KERNEL_OK")
</pallas_src>

<mosaic_0001>
module attributes {stable_mosaic.version = 11 : i64} {
  func.func @_gem_kernel(%arg0: i32, %arg1: i32, %arg2: i32, %arg3: memref<1xf32, #tpu.memory_space<smem>>, %arg4: memref<2x16x128xf32, #tpu.memory_space<vmem>>, %arg5: memref<2x1x128xf32, #tpu.memory_space<vmem>>, %arg6: memref<2x1x128xf32, #tpu.memory_space<vmem>>) attributes {dimension_semantics = [#tpu.dimension_semantics<parallel>, #tpu.dimension_semantics<parallel>, #tpu.dimension_semantics<arbitrary>], iteration_bounds = array<i64: 1, 1, 1>, scalar_prefetch = 0 : i64, scratch_operands = 1 : i64, tpu.core_type = #tpu.core_type<tc>, window_params = [{transform_indices = @transform_0, window_bounds = array<i64: 1>}, {transform_indices = @transform_1, window_bounds = array<i64: 2, 16, 128>}, {transform_indices = @transform_2, window_bounds = array<i64: 2, 1, 128>}]} {
    %c0_i32 = arith.constant 0 : i32
    %0 = arith.cmpi eq, %arg2, %c0_i32 : i32
    %1 = arith.extui %0 : i1 to i32
    %c0_i32_0 = arith.constant 0 : i32
    %2 = arith.cmpi ne, %1, %c0_i32_0 : i32
    scf.if %2 {
      %cst_13 = arith.constant 0.000000e+00 : f32
      %19 = vector.broadcast %cst_13 : f32 to vector<2x1x128xf32>
      %c0_14 = arith.constant 0 : index
      %c0_15 = arith.constant 0 : index
      %c0_16 = arith.constant 0 : index
      %20 = vector.load %arg6[%c0_14, %c0_15, %c0_16] : memref<2x1x128xf32, #tpu.memory_space<vmem>>, vector<2x1x128xf32>
      tpu.vector_store %arg6[%c0_14, %c0_15, %c0_16], %19 {strides = array<i32>} : memref<2x1x128xf32, #tpu.memory_space<vmem>>, vector<2x1x128xf32>,
    } else {
    }
    %c0 = arith.constant 0 : index
    %c0_1 = arith.constant 0 : index
    %c0_2 = arith.constant 0 : index
    %3 = vector.load %arg4[%c0, %c0_1, %c0_2] : memref<2x16x128xf32, #tpu.memory_space<vmem>>, vector<2x16x128xf32>
    %cst = arith.constant 9.99999997E-7 : f32
    %4 = vector.broadcast %cst : f32 to vector<2x16x128xf32>
    %5 = arith.maximumf %3, %4 : vector<2x16x128xf32>
    %c0_3 = arith.constant 0 : index
    %6 = memref.load %arg3[%c0_3] : memref<1xf32, #tpu.memory_space<smem>>
    %7 = math.log %5 : vector<2x16x128xf32>
    %8 = vector.broadcast %6 : f32 to vector<2x16x128xf32>
    %9 = arith.mulf %8, %7 : vector<2x16x128xf32>
    %10 = math.exp %9 : vector<2x16x128xf32>
    %c0_4 = arith.constant 0 : index
    %c0_5 = arith.constant 0 : index
    %c0_6 = arith.constant 0 : index
    %11 = vector.load %arg6[%c0_4, %c0_5, %c0_6] : memref<2x1x128xf32, #tpu.memory_space<vmem>>, vector<2x1x128xf32>
    %cst_7 = arith.constant dense<0.000000e+00> : vector<2x128xf32>
    %12 = vector.multi_reduction <add>, %10, %cst_7 [1] : vector<2x16x128xf32> to vector<2x128xf32>
    %13 = vector.shape_cast %12 : vector<2x128xf32> to vector<2x1x128xf32>
    %14 = arith.addf %11, %13 : vector<2x1x128xf32>
    %c0_8 = arith.constant 0 : index
    %c0_9 = arith.constant 0 : index
    %c0_10 = arith.constant 0 : index
    %15 = vector.load %arg6[%c0_8, %c0_9, %c0_10] : memref<2x1x128xf32, #tpu.memory_space<vmem>>, vector<2x1x128xf32>
    tpu.vector_store %arg6[%c0_8, %c0_9, %c0_10], %14 {strides = array<i32>} : memref<2x1x128xf32, #tpu.memory_space<vmem>>, vector<2x1x128xf32>,
    %c0_i32_11 = arith.constant 0 : i32
    %16 = arith.cmpi eq, %arg2, %c0_i32_11 : i32
    %17 = arith.extui %16 : i1 to i32
    %c0_i32_12 = arith.constant 0 : i32
    %18 = arith.cmpi ne, %17, %c0_i32_12 : i32
    scf.if %18 {
      %c0_13 = arith.constant 0 : index
      %c0_14 = arith.constant 0 : index
      %c0_15 = arith.constant 0 : index
      %19 = vector.load %arg6[%c0_13, %c0_14, %c0_15] : memref<2x1x128xf32, #tpu.memory_space<vmem>>, vector<2x1x128xf32>
      %cst_16 = arith.constant 6.250000e-02 : f32
      %20 = vector.broadcast %cst_16 : f32 to vector<2x1x128xf32>
      %21 = arith.mulf %19, %20 : vector<2x1x128xf32>
      %c0_17 = arith.constant 0 : index
      %22 = memref.load %arg3[%c0_17] : memref<1xf32, #tpu.memory_space<smem>>
      %cst_18 = arith.constant 1.000000e+00 : f32
      %23 = arith.divf %cst_18, %22 : f32
      %24 = math.log %21 : vector<2x1x128xf32>
      %25 = vector.broadcast %23 : f32 to vector<2x1x128xf32>
      %26 = arith.mulf %24, %25 : vector<2x1x128xf32>
      %27 = math.exp %26 : vector<2x1x128xf32>
      %c0_19 = arith.constant 0 : index
      %c0_20 = arith.constant 0 : index
      %c0_21 = arith.constant 0 : index
      %28 = vector.load %arg5[%c0_19, %c0_20, %c0_21] : memref<2x1x128xf32, #tpu.memory_space<vmem>>, vector<2x1x128xf32>
      tpu.vector_store %arg5[%c0_19, %c0_20, %c0_21], %27 {strides = array<i32>} : memref<2x1x128xf32, #tpu.memory_space<vmem>>, vector<2x1x128xf32>,
    } else {
    }
    return
  }
  func.func @transform_0(%arg0: i32, %arg1: i32, %arg2: i32) -> i32 {
    %c0_i32 = arith.constant 0 : i32
    %c0_i32_0 = arith.constant 0 : i32
    return %c0_i32 : i32
  }
  func.func @transform_1(%arg0: i32, %arg1: i32, %arg2: i32) -> (i32, i32, i32) {
    %c0_i32 = arith.constant 0 : i32
    return %arg0, %arg2, %arg1 : i32, i32, i32
  }
  func.func @transform_2(%arg0: i32, %arg1: i32, %arg2: i32) -> (i32, i32, i32) {
    %c0_i32 = arith.constant 0 : i32
    %c0_i32_0 = arith.constant 0 : i32
    return %arg0, %c0_i32, %arg1 : i32, i32, i32
  }
}

</mosaic_0001>

<llo_original>
// kernel: tpu_custom_call.1
$region0: #{tpu_custom_call.1}
  #allocation0 [shape = 'u32[]', space=smem, size = 0x4, offset = 0x4, fixed_abs, tag = 'smem constant byte address 0x4 - core index']
  #allocation1 [shape = 'u32[72,128]{1,0:T(1,128)}', space=vmem, size = 0x9000, scoped, tag = 'internal scratch']
  #allocation2 [shape = 'f32[2,1,128]{2,1,0:T(1,128)}', space=vmem, size = 0x400, scoped, tag = 'scratch operand']
  #allocation3 [shape = 'f32[1]{0:T(128)S(6)}', space=smem, size = 0x200, scoped, tag = 'scoped memory for tpu_custom_call.1']
  %s0 = inlined_call_operand.<no memory space> [shape: f32[1], index: 0, kind: input, shape index: {}]
  %s1 = inlined_call_operand.hbm [shape: f32[2,16,128], index: 1, kind: input, shape index: {}]
  %s2 = inlined_call_operand.hbm [shape: f32[2,1,128], index: 2, kind: output, shape index: {}]
  %s3 = sld [smem:[#allocation0]]
  $region30: #{tpu_custom_call.1} parent=0
    _
  %s5 = ssub.s32 1, %s3
  %s6 = scalar_select 0, %s5, %s3
  %7 = sst [smem:[#allocation3]] %s0
  $region1: #{tpu_custom_call.1} parent=0
    #allocation4 [shape = 'u8[16384]{0}', space=vmem, size = 0x4000, scoped, tag = 'input window, operand 1, single buffered']
    #allocation5 [shape = 's32[1]{0}', space=sflag, size = 0x4, scoped, tag = 'scoped memory for tpu_custom_call.1']
    #allocation6 [shape = 's32[1]{0}', space=sflag, size = 0x4, scoped, tag = 'scoped memory for tpu_custom_call.1']
    #allocation7 [shape = 'u8[1024]{0}', space=vmem, size = 0x400, scoped, tag = 'output window, operand 0, single buffered']
    %8 = vsyncpa [#allocation5], 0
    %9 = vsyncpa [#allocation6], 0
    // Predicated region
    $region2: #{tpu_custom_call.1} parent=1 // pred_check
      _
    $region3: #{tpu_custom_call.1} parent=1 // pred_check_branch
      %11 = sbr.rel (0) target = $region5
    $region4: #{tpu_custom_call.1} parent=1 // pred_region
      _
    $region5: #{tpu_custom_call.1} parent=1 // pred_fallthru
      _
    // Predicated region
    $region6: #{tpu_custom_call.1} parent=1 // pred_check
      _
    $region7: #{tpu_custom_call.1} parent=1 // pred_check_branch
      %13 = sbr.rel (0) target = $region9
    $region8: #{tpu_custom_call.1} parent=1 // pred_region
      %15 = vsyncadd [#allocation5], 0
      %s16 = sshll.u32 %s1, 4
      %s17 = int_to_ptr.hbm [resolvable:$true] %s16
      %s18 = sshll.u32 [#allocation4], 4
      %s19 = int_to_ptr.vmem [resolvable:$true] %s18
      %24 = dma.hbm_to_vmem [thread:$0]  %s17, 512, %s19, [#allocation5], 128, 128, 8
    $region9: #{tpu_custom_call.1} parent=1 // pred_fallthru
      _
    // Predicated region
    $region10: #{tpu_custom_call.1} parent=1 // pred_check
      _
    $region11: #{tpu_custom_call.1} parent=1 // pred_check_branch
      %26 = sbr.rel (0) target = $region13
    $region12: #{tpu_custom_call.1} parent=1 // pred_region
      %28 = dma.done [#allocation5], 512
    $region13: #{tpu_custom_call.1} parent=1 // pred_fallthru
      _
    %p29 = scmp.eq.s32.totalorder 0, 0
    // Predicated region
    $region14: #{tpu_custom_call.1} parent=1 // pred_check
      %p30 = pneg %p29
    $region15: #{tpu_custom_call.1} parent=1 // pred_check_branch
      %32 = sbr.rel (%p30) target = $region17
    $region16: #{tpu_custom_call.1} parent=1 // pred_region
      %33 = vst [vmem:[#allocation2] sm:$0x1] 0.0
      %34 = vst [vmem:[#allocation2 + $0x1] sm:$0x1] 0.0
    $region17: #{tpu_custom_call.1} parent=1 // pred_fallthru
      _
    %v35 = vld [vmem:[#allocation4] sm:$0xff]
    %v36 = vld [vmem:[#allocation4 + $0x8] sm:$0xff]
    %v37 = vld [vmem:[#allocation4 + $0x10] sm:$0xff]
    %v38 = vld [vmem:[#allocation4 + $0x18] sm:$0xff]
    %v39 = vmax.f32 %v35, 1e-06
    %v40 = vmax.f32 %v36, 1e-06
    %v41 = vmax.f32 %v37, 1e-06
    %v42 = vmax.f32 %v38, 1e-06
    %s43 = sld [smem:[#allocation3]]
    %v44 = vlog2.pop %v39
    %v45 = vmul.f32 %v44, 0.6931472
    %v46 = vlog2.pop %v40
    %v47 = vmul.f32 %v46, 0.6931472
    %v48 = vlog2.pop %v41
    %v49 = vmul.f32 %v48, 0.6931472
    %v50 = vlog2.pop %v42
    %v51 = vmul.f32 %v50, 0.6931472
    %v52 = vstv %s43
    %v53 = vmul.f32 %v52, %v45
    %v54 = vmul.f32 %v52, %v47
    %v55 = vmul.f32 %v52, %v49
    %v56 = vmul.f32 %v52, %v51
    %v57 = vmul.f32 %v53, 1.442695
    %v58 = vpow.pop %v57
    %v59 = vmul.f32 %v54, 1.442695
    %v60 = vpow.pop %v59
    %v61 = vmul.f32 %v55, 1.442695
    %v62 = vpow.pop %v61
    %v63 = vmul.f32 %v56, 1.442695
    %v64 = vpow.pop %v63
    %v65 = vld [vmem:[#allocation2] sm:$0x1]
    %v66 = vld [vmem:[#allocation2 + $0x1] sm:$0x1]
    %v67 = vadd.f32 %v58, %v60
    %v68 = vrot.slane %v67, 4
    %v69 = vadd.f32 %v67, %v68
    %v70 = vrot.slane %v69, 2
    %v71 = vadd.f32 %v69, %v70
    %v72 = vrot.slane %v71, 1
    %v73 = vadd.f32 %v71, %v72
    %v74 = vadd.f32 %v62, %v64
    %v75 = vrot.slane %v74, 4
    %v76 = vadd.f32 %v74, %v75
    %v77 = vrot.slane %v76, 2
    %v78 = vadd.f32 %v76, %v77
    %v79 = vrot.slane %v78, 1
    %v80 = vadd.f32 %v78, %v79
    %v81 = vadd.f32 %v65, %v73
    %v82 = vadd.f32 %v66, %v80
    %83 = vst [vmem:[#allocation2] sm:$0x1] %v81
    %84 = vst [vmem:[#allocation2 + $0x1] sm:$0x1] %v82
    // Predicated region
    $region18: #{tpu_custom_call.1} parent=1 // pred_check
      %p85 = pneg %p29
    $region19: #{tpu_custom_call.1} parent=1 // pred_check_branch
      %87 = sbr.rel (%p85) target = $region21
    $region20: #{tpu_custom_call.1} parent=1 // pred_region
      %v88 = vld [vmem:[#allocation2] sm:$0x1]
      %v89 = vld [vmem:[#allocation2 + $0x1] sm:$0x1]
      %v90 = vmul.f32 %v88, 0.0625
      %v91 = vmul.f32 %v89, 0.0625
      %s92 = sld [smem:[#allocation3]]
      %v93 = vstv %s92
      %v94 = vrcp.pop %v93
      %v95 = vmul.f32 %v93, %v94
      %v96 = vsub.f32 1.0, %v95
      %v97 = vmul.f32 %v94, %v96
      %v98 = vadd.f32 %v94, %v97
      %vm99 = vweird.f32 %v93
      %vm100 = vweird.f32 %v94
      %vm101 = vmor %vm99, %vm100
      %v102 = vsel %vm101, %v94, %v98
      %v103 = vand.u32 2147483647, %v93
      %vm104 = vcmp.eq.f32.partialorder %v103, 8.507059e+37
      %v105 = vand.u32 %v93, 2147483648
      %v106 = vor.u32 1.1754944e-38, %v105
      %v107 = vsel %vm104, %v106, %v102
      %s108 = vtos %v107
      %v109 = vlog2.pop %v90
      %v110 = vmul.f32 %v109, 0.6931472
      %v111 = vlog2.pop %v91
      %v112 = vmul.f32 %v111, 0.6931472
      %v113 = vstv %s108
      %v114 = vmul.f32 %v110, %v113
      %v115 = vmul.f32 %v112, %v113
      %v116 = vmul.f32 %v114, 1.442695
      %v117 = vpow.pop %v116
      %v118 = vmul.f32 %v115, 1.442695
      %v119 = vpow.pop %v118
      %120 = vst [vmem:[#allocation7] sm:$0x1] %v117
      %121 = vst [vmem:[#allocation7 + $0x1] sm:$0x1] %v119
    $region21: #{tpu_custom_call.1} parent=1 // pred_fallthru
      _
    // Predicated region
    $region22: #{tpu_custom_call.1} parent=1 // pred_check
      _
    $region23: #{tpu_custom_call.1} parent=1 // pred_check_branch
      %123 = sbr.rel (0) target = $region25
    $region24: #{tpu_custom_call.1} parent=1 // pred_region
      %125 = vsyncadd [#allocation6], 0
      %s126 = sshll.u32 [#allocation7], 4
      %s127 = int_to_ptr.vmem [resolvable:$true] %s126
      %s128 = sshll.u32 %s2, 4
      %s129 = int_to_ptr.hbm [resolvable:$true] %s128
      %134 = dma.vmem_to_hbm [thread:$0]  %s127, 32, %s129, [#allocation6], 16, 16, 1
    $region25: #{tpu_custom_call.1} parent=1 // pred_fallthru
      _
    // Predicated region
    $region26: #{tpu_custom_call.1} parent=1 // pred_check
      _
    $region27: #{tpu_custom_call.1} parent=1 // pred_check_branch
      %136 = sbr.rel (0) target = $region29
    $region28: #{tpu_custom_call.1} parent=1 // pred_region
      %138 = dma.done [#allocation6], 32
    $region29: #{tpu_custom_call.1} parent=1 // pred_fallthru
      _
    %139 = vsyncpa [#allocation5], 1
    %140 = vsyncpa [#allocation6], 1

</llo_original>
